<compile_context>
chip_gen: v5e
topology: v5e:2x2
jax: 0.10.0
libtpu: 0.0.40
codegen_flags: <defaults>
</compile_context>

<pallas_src>
import jax
import jax.numpy as jnp
from jax.experimental import pallas as pl
from jax.experimental.pallas import tpu as pltpu


HIDDEN_SIZE = 128
TAG_SIZE = 16  # see note above


def linear_kernel(x_ref, w_ref, b_ref, o_ref):
    # x_ref: (TM, H)   w_ref: (H, T)   b_ref: (1, T)   o_ref: (TM, T)
    acc = jnp.dot(x_ref[...], w_ref[...], preferred_element_type=jnp.float32)
    o_ref[...] = (acc + b_ref[...]).astype(o_ref.dtype)


def _device_kind():
    try:
        return jax.devices()[0].device_kind.lower()
    except Exception:
        return ""


def _round_up(v, m):
    return -(-v // m) * m


def linear_htov(x, w_t, b, *, tm=None, min_rows_for_pallas=0):
    """x: (..., H); w_t: (H, T) (weight pre-transposed); b: (T,).

    Returns (..., T) in x.dtype.  tm=None picks a generation-aware row tile.
    """
    orig_shape = x.shape
    H = orig_shape[-1]
    T = w_t.shape[-1]
    out_dtype = x.dtype

    x2 = x.reshape(-1, H)
    N = x2.shape[0]

    # Optional plain-jnp fallback for degenerate tiny inputs (off by default so
    # the Pallas path is always the one under test).
    if N < min_rows_for_pallas:
        out = (jnp.dot(x2, w_t).astype(jnp.float32) + b.astype(jnp.float32))
        return out.astype(out_dtype).reshape(*orig_shape[:-1], T)

    kind = _device_kind()
    is_v7 = "v7" in kind
    is_v5e = ("v5e" in kind) or ("v5 lite" in kind) or ("v5lite" in kind)

    # Sublane granularity follows the packed min-tile of the input dtype:
    # 8 rows for 32-bit, 16 for 16-bit, 32 for 8-bit inputs.
    in_itemsize = jnp.dtype(x2.dtype).itemsize
    sub = max(8, 32 // max(in_itemsize, 1))

    # --- row-tile selection ---------------------------------------------------
    if tm is None:
        tm = 8192 if is_v7 else 4096
        if is_v5e:
            tm = 4096  # 16 MiB scoped-VMEM default on v5e
    tm_eff = min(int(tm), _round_up(N, sub))
    if is_v7:
        # Keep >= 2 grid steps when N permits so CORE_PARALLEL has work for
        # both TensorCores.  Single-TC chips skip this (it only shrinks tiles).
        half = _round_up(-(-N // 2), sub)
        tm_eff = min(tm_eff, max(half, sub))
    tm_eff = _round_up(max(tm_eff, sub), sub)

    grid_len = pl.cdiv(N, tm_eff)

    b2 = b.reshape(1, T).astype(jnp.float32)

    if is_v7 and grid_len >= 2:
        dim_sem = (pltpu.CORE_PARALLEL,)
    else:
        dim_sem = ("arbitrary",)

    out_itemsize = jnp.dtype(out_dtype).itemsize
    cost = pl.CostEstimate(
        flops=2 * N * H * T,
        transcendentals=0,
        bytes_accessed=(N * H * in_itemsize
                        + H * T * jnp.dtype(w_t.dtype).itemsize
                        + T * 4
                        + N * T * out_itemsize),
    )

    out = pl.pallas_call(
        linear_kernel,
        out_shape=jax.ShapeDtypeStruct((N, T), out_dtype),
        grid=(grid_len,),
        in_specs=[
            pl.BlockSpec((tm_eff, H), lambda i: (i, 0)),   # rows of x (pipelined)
            pl.BlockSpec((H, T), lambda i: (0, 0)),        # full weight, resident
            pl.BlockSpec((1, T), lambda i: (0, 0)),        # bias, resident
        ],
        out_specs=pl.BlockSpec((tm_eff, T), lambda i: (i, 0)),
        compiler_params=pltpu.CompilerParams(dimension_semantics=dim_sem),
        cost_estimate=cost,
    )(x2, w_t, b2)

    return out.reshape(*orig_shape[:-1], T)


if __name__ == "__main__":
    key = jax.random.PRNGKey(0)
    kw, kb, kx1, kx2, kx3 = jax.random.split(key, 5)

    # Deterministic parameter init (matching nn.Linear's uniform range).
    bound = 1.0 / (HIDDEN_SIZE ** 0.5)
    w = jax.random.uniform(kw, (TAG_SIZE, HIDDEN_SIZE), jnp.float32, -bound, bound)
    b = jax.random.uniform(kb, (TAG_SIZE,), jnp.float32, -bound, bound)
    w_t = jnp.transpose(w)  # kernel expects weight pre-transposed to (H, T)

    # Case 1: small 3-D input (batch=2, seq=8, hidden=128) -> N = 16 rows.
    x = jax.random.normal(kx1, (2, 8, HIDDEN_SIZE), dtype=jnp.float32)
    out = linear_htov(x, w_t, b)
    jax.block_until_ready(out)
    ref = x @ w.T + b
    assert out.shape == (2, 8, TAG_SIZE)
    assert jnp.allclose(out, ref, atol=1e-4, rtol=1e-4), "mismatch vs reference (case 1)"

    # Case 2: ragged row count (N=15) — exercises the partial-final-block path
    # (no wrapper-side pad / slice any more).
    x_r = jax.random.normal(kx2, (3, 5, HIDDEN_SIZE), dtype=jnp.float32)
    out_r = linear_htov(x_r, w_t, b)
    jax.block_until_ready(out_r)
    ref_r = x_r @ w.T + b
    assert out_r.shape == (3, 5, TAG_SIZE)
    assert jnp.allclose(out_r, ref_r, atol=1e-4, rtol=1e-4), "mismatch vs reference (case 2)"

    # Case 3: multiple grid steps with a partial last block (N=400, tm=64 -> 7 steps).
    x_m = jax.random.normal(kx3, (2, 200, HIDDEN_SIZE), dtype=jnp.float32)
    out_m = linear_htov(x_m, w_t, b, tm=64)
    jax.block_until_ready(out_m)
    ref_m = x_m @ w.T + b
    assert out_m.shape == (2, 200, TAG_SIZE)
    assert jnp.allclose(out_m, ref_m, atol=1e-4, rtol=1e-4), "mismatch vs reference (case 3)"

    print("KERNEL_OK")
</pallas_src>

<mosaic_0001>
module attributes {stable_mosaic.version = 11 : i64} {
  func.func @linear_kernel(%arg0: i32, %arg1: memref<16x128xf32, #tpu.memory_space<vmem>>, %arg2: memref<128x16xf32, #tpu.memory_space<vmem>>, %arg3: memref<1x16xf32, #tpu.memory_space<vmem>>, %arg4: memref<16x16xf32, #tpu.memory_space<vmem>>) attributes {dimension_semantics = [#tpu.dimension_semantics<arbitrary>], iteration_bounds = array<i64: 1>, scalar_prefetch = 0 : i64, scratch_operands = 0 : i64, tpu.core_type = #tpu.core_type<tc>, window_params = [{transform_indices = @transform_0, window_bounds = array<i64: 16, 128>}, {pipeline_mode = #tpu.pipeline_mode<synchronous>, transform_indices = @transform_1, window_bounds = array<i64: 128, 16>}, {pipeline_mode = #tpu.pipeline_mode<synchronous>, transform_indices = @transform_2, window_bounds = array<i64: 1, 16>}, {transform_indices = @transform_3, window_bounds = array<i64: 16, 16>}]} {
    %c0 = arith.constant 0 : index
    %c0_0 = arith.constant 0 : index
    %0 = vector.load %arg1[%c0, %c0_0] : memref<16x128xf32, #tpu.memory_space<vmem>>, vector<16x128xf32>
    %c0_1 = arith.constant 0 : index
    %c0_2 = arith.constant 0 : index
    %1 = vector.load %arg2[%c0_1, %c0_2] : memref<128x16xf32, #tpu.memory_space<vmem>>, vector<128x16xf32>
    %cst = arith.constant dense<0.000000e+00> : vector<16x16xf32>
    %2 = tpu.matmul %0, %1, %cst {dimension_numbers = #tpu.dot_dimension_numbers<[1], [0], [0], [1], [0, 0, 1, 1], [], []>} : vector<16x128xf32>, vector<128x16xf32>, vector<16x16xf32> -> vector<16x16xf32>
    %c0_3 = arith.constant 0 : index
    %c0_4 = arith.constant 0 : index
    %3 = vector.load %arg3[%c0_3, %c0_4] : memref<1x16xf32, #tpu.memory_space<vmem>>, vector<1x16xf32>
    %4 = vector.broadcast %3 : vector<1x16xf32> to vector<16x16xf32>
    %5 = arith.addf %2, %4 : vector<16x16xf32>
    %c0_5 = arith.constant 0 : index
    %c0_6 = arith.constant 0 : index
    %6 = vector.load %arg4[%c0_5, %c0_6] : memref<16x16xf32, #tpu.memory_space<vmem>>, vector<16x16xf32>
    tpu.vector_store %arg4[%c0_5, %c0_6], %5 {strides = array<i32>} : memref<16x16xf32, #tpu.memory_space<vmem>>, vector<16x16xf32>,
    return
  }
  func.func @transform_0(%arg0: i32) -> (i32, i32) {
    %c0_i32 = arith.constant 0 : i32
    %c0_i32_0 = arith.constant 0 : i32
    return %arg0, %c0_i32 : i32, i32
  }
  func.func @transform_1(%arg0: i32) -> (i32, i32) {
    %c0_i32 = arith.constant 0 : i32
    %c0_i32_0 = arith.constant 0 : i32
    %c0_i32_1 = arith.constant 0 : i32
    return %c0_i32, %c0_i32_0 : i32, i32
  }
  func.func @transform_2(%arg0: i32) -> (i32, i32) {
    %c0_i32 = arith.constant 0 : i32
    %c0_i32_0 = arith.constant 0 : i32
    %c0_i32_1 = arith.constant 0 : i32
    return %c0_i32, %c0_i32_0 : i32, i32
  }
  func.func @transform_3(%arg0: i32) -> (i32, i32) {
    %c0_i32 = arith.constant 0 : i32
    %c0_i32_0 = arith.constant 0 : i32
    return %arg0, %c0_i32 : i32, i32
  }
}

</mosaic_0001>

<llo_original>
// kernel: tpu_custom_call.1
$region0: #{tpu_custom_call.1}
  #allocation0 [shape = 'u32[]', space=smem, size = 0x4, offset = 0x4, fixed_abs, tag = 'smem constant byte address 0x4 - core index']
  #allocation1 [shape = 'u32[72,128]{1,0:T(1,128)}', space=vmem, size = 0x9000, scoped, tag = 'internal scratch']
  %s0 = inlined_call_operand.vmem [shape: f32[16,128], index: 0, kind: input, shape index: {}]
  %s1 = inlined_call_operand.vmem [shape: f32[128,16], index: 1, kind: input, shape index: {}]
  %s2 = inlined_call_operand.vmem [shape: f32[1,16], index: 2, kind: input, shape index: {}]
  %s3 = inlined_call_operand.hbm [shape: f32[16,16], index: 3, kind: output, shape index: {}]
  %s4 = sld [smem:[#allocation0]]
  $region22: #{tpu_custom_call.1} parent=0
    _
  %s6 = ssub.s32 1, %s4
  %s7 = scalar_select 0, %s6, %s4
  $region1: #{tpu_custom_call.1} parent=0
    #allocation2 [shape = 'u8[8192]{0}', space=vmem, size = 0x2000, scoped, tag = 'output window, operand 0, single buffered']
    #allocation3 [shape = 's32[1]{0}', space=sflag, size = 0x4, scoped, tag = 'scoped memory for tpu_custom_call.1']
    %8 = vsyncpa [#allocation3], 0
    // Predicated region
    $region2: #{tpu_custom_call.1} parent=1 // pred_check
      _
    $region3: #{tpu_custom_call.1} parent=1 // pred_check_branch
      %10 = sbr.rel (0) target = $region5
    $region4: #{tpu_custom_call.1} parent=1 // pred_region
      _
    $region5: #{tpu_custom_call.1} parent=1 // pred_fallthru
      _
    // Predicated region
    $region6: #{tpu_custom_call.1} parent=1 // pred_check
      _
    $region7: #{tpu_custom_call.1} parent=1 // pred_check_branch
      %12 = sbr.rel (0) target = $region9
    $region8: #{tpu_custom_call.1} parent=1 // pred_region
      _
    $region9: #{tpu_custom_call.1} parent=1 // pred_fallthru
      _
    // Predicated region
    $region10: #{tpu_custom_call.1} parent=1 // pred_check
      _
    $region11: #{tpu_custom_call.1} parent=1 // pred_check_branch
      %14 = sbr.rel (0) target = $region13
    $region12: #{tpu_custom_call.1} parent=1 // pred_region
      _
    $region13: #{tpu_custom_call.1} parent=1 // pred_fallthru
      _
    %v15 = vld [vmem:[%s0] sm:$0xff]
    %v16 = vld [vmem:[%s0 + $0x8] sm:$0xff]
    %v17 = vld [vmem:[%s1] sm:$0xff]
    %v18 = vld [vmem:[%s1 + $0x8] sm:$0xff]
    %v19 = vld [vmem:[%s1 + $0x10] sm:$0xff]
    %v20 = vld [vmem:[%s1 + $0x18] sm:$0xff]
    %v21 = vld [vmem:[%s1 + $0x20] sm:$0xff]
    %v22 = vld [vmem:[%s1 + $0x28] sm:$0xff]
    %v23 = vld [vmem:[%s1 + $0x30] sm:$0xff]
    %v24 = vld [vmem:[%s1 + $0x38] sm:$0xff]
    %v25 = vld [vmem:[%s1 + $0x40] sm:$0xff]
    %v26 = vld [vmem:[%s1 + $0x48] sm:$0xff]
    %v27 = vld [vmem:[%s1 + $0x50] sm:$0xff]
    %v28 = vld [vmem:[%s1 + $0x58] sm:$0xff]
    %v29 = vld [vmem:[%s1 + $0x60] sm:$0xff]
    %v30 = vld [vmem:[%s1 + $0x68] sm:$0xff]
    %v31 = vld [vmem:[%s1 + $0x70] sm:$0xff]
    %v32 = vld [vmem:[%s1 + $0x78] sm:$0xff]
    %v33 = vld [vmem:[%s2] sm:$0x1]
    %v35 = vperm.slane %v33, 0
    %37 = vmatpush.msra.mxu0 %v32
    %38 = vmatpush.msra.mxu0 %v31
    %39 = vmatpush.msra.mxu0 %v30
    %40 = vmatpush.msra.mxu0 %v29
    %41 = vmatpush.msra.mxu0 %v28
    %42 = vmatpush.msra.mxu0 %v27
    %43 = vmatpush.msra.mxu0 %v26
    %44 = vmatpush.msra.mxu0 %v25
    %45 = vmatpush.msra.mxu0 %v24
    %46 = vmatpush.msra.mxu0 %v23
    %47 = vmatpush.msra.mxu0 %v22
    %48 = vmatpush.msra.mxu0 %v21
    %49 = vmatpush.msra.mxu0 %v20
    %50 = vmatpush.msra.mxu0 %v19
    %51 = vmatpush.msra.mxu0 %v18
    %52 = vmatpush.msra.mxu0 %v17
    %53 = vmatmul.f32.gmra.mxu0 %v15
    %v54 = vpop.f32.mrf.mxu0
    %v55 = vadd.f32 %v35, %v54
    %56 = vmatmul.f32.gmra.mxu0 %v16
    %v57 = vpop.f32.mrf.mxu0
    %v58 = vadd.f32 %v35, %v57
    %59 = vdwg.mxu0
    %vm60 = vcmask 130048
    %61 = vst.msk [vmem:[#allocation2] sm:$0xff] %vm60, %v55
    %62 = vst.msk [vmem:[#allocation2 + $0x8] sm:$0xff] %vm60, %v58
    // Predicated region
    $region14: #{tpu_custom_call.1} parent=1 // pred_check
      _
    $region15: #{tpu_custom_call.1} parent=1 // pred_check_branch
      %64 = sbr.rel (0) target = $region17
    $region16: #{tpu_custom_call.1} parent=1 // pred_region
      %66 = vsyncadd [#allocation3], 0
      %s67 = sshll.u32 [#allocation2], 4
      %s68 = int_to_ptr.vmem [resolvable:$true] %s67
      %s69 = sshll.u32 %s3, 4
      %s70 = int_to_ptr.hbm [resolvable:$true] %s69
      %75 = dma.vmem_to_hbm [thread:$0]  %s68, 256, %s70, [#allocation3], 128, 128, 8
    $region17: #{tpu_custom_call.1} parent=1 // pred_fallthru
      _
    // Predicated region
    $region18: #{tpu_custom_call.1} parent=1 // pred_check
      _
    $region19: #{tpu_custom_call.1} parent=1 // pred_check_branch
      %77 = sbr.rel (0) target = $region21
    $region20: #{tpu_custom_call.1} parent=1 // pred_region
      %79 = dma.done [#allocation3], 256
    $region21: #{tpu_custom_call.1} parent=1 // pred_fallthru
      _
    %80 = vsyncpa [#allocation3], 1

</llo_original>
